<compile_context>
chip_gen: v6e
topology: v6e:2x2x1
jax: 0.10.0
libtpu: 0.0.40
codegen_flags: <defaults>
</compile_context>

<pallas_src>
import functools

import jax
import jax.numpy as jnp
from jax import lax
from jax.experimental import pallas as pl
from jax.experimental.pallas import tpu as pltpu

TEMPERATURE = 0.1
COS_EPS = 1e-8        # nn.CosineSimilarity default eps (clamp on norm product)
NORM_EPS = 1e-4       # sqrt(COS_EPS): equivalent per-row clamp after normalization
LOG_EPS = 1e-6        # epsilon added before the log, as in the torch module
NEG_FLOOR = 1e-30     # guard for rows with zero negatives (torch -> inf/nan)


def ntxent_kernel(f_ref, pmask_ref, nmask_ref, loss_ref, fnt_ref, *,
                  temperature, n_total, row_tile):
    i = pl.program_id(0)
    inv_t = jnp.float32(1.0 / temperature)

    # ---- step 0: normalize all rows once, store transposed (MXU-stationary) ----
    @pl.when(i == 0)
    def _():
        f = f_ref[...].astype(jnp.float32)                        # [N, D]
        sq = jnp.sum(f * f, axis=1, keepdims=True)                # [N, 1]
        inv_norm = 1.0 / jnp.maximum(jnp.sqrt(sq), NORM_EPS)      # O(N) divide only
        fnt_ref[...] = (f * inv_norm).T.astype(fnt_ref.dtype)     # [D, N]
        loss_ref[...] = jnp.zeros_like(loss_ref)

    # ---- query tile: slice resident raw features, normalize (O(tm*D)) ----
    row0 = pl.multiple_of(i * row_tile, row_tile)
    fq = f_ref[pl.ds(row0, row_tile), :].astype(jnp.float32)      # [tm, D]
    qsq = jnp.sum(fq * fq, axis=1, keepdims=True)                 # [tm, 1]
    fq = (fq * (1.0 / jnp.maximum(jnp.sqrt(qsq), NORM_EPS))).astype(fnt_ref.dtype)

    # ---- cosine-similarity row tile on the MXU: [tm, D] @ [D, N] -> [tm, N] ----
    sim = jnp.dot(fq, fnt_ref[...],
                  preferred_element_type=jnp.float32) * inv_t     # [tm, N]

    pmask = pmask_ref[...].astype(jnp.float32)                    # [tm, N]
    nmask = nmask_ref[...].astype(jnp.float32)                    # [tm, N]

    # ---- self-contrast removal (off-diagonal mask for this row tile) ----
    rows = row0 + lax.broadcasted_iota(jnp.int32, sim.shape, 0)
    cols = lax.broadcasted_iota(jnp.int32, sim.shape, 1)
    off = (rows != cols).astype(jnp.float32)
    pm = pmask * off
    nm = nmask * off

    # ---- positive counts (rows with zero positives -> divide by 1) ----
    psum = jnp.sum(pm, axis=1, keepdims=True)                     # [tm, 1]
    psum = jnp.where(psum == 0.0, 1.0, psum)

    # ---- NT-Xent log-prob.  cosine <= 1 so sim <= inv_t: the constant shift
    #      keeps exp() in (0, 1] without a per-row max; e/neg is shift-invariant.
    e = jnp.exp(sim - inv_t)                                      # [tm, N]
    neg = jnp.sum(e * nm, axis=1, keepdims=True)                  # [tm, 1]
    neg = jnp.maximum(neg, jnp.float32(NEG_FLOOR))                # no-negatives guard
    inv_neg = pl.reciprocal(neg)                                  # [tm, 1], EUP
    log_prob = -jnp.log(e * inv_neg + LOG_EPS) * pm               # [tm, N]
    row_loss = jnp.sum(log_prob, axis=1, keepdims=True) * pl.reciprocal(psum)

    partial = jnp.sum(row_loss, axis=0, keepdims=True)            # (1, 1)
    loss_ref[...] += partial * jnp.float32(1.0 / n_total)


def _pick_row_tile(n, mask_itemsize=4):
    """Largest power-of-two row tile dividing N whose streamed masks fit VMEM."""
    budget = 24 << 20  # streamed-mask budget; leaves room for features + [D,N] scratch
    for tm in (512, 256, 128, 64):
        # 2 masks x 2 pipeline buffers x (tm x N) bytes
        if n % tm == 0 and (4 * tm * n * mask_itemsize) <= budget:
            return tm
    return n  # small / ragged problems: single tile


def ntxent_pallas(features, positive_mask, negative_mask, temperature=TEMPERATURE,
                  *, row_tile=None, matmul_dtype=jnp.float32):
    n, d = features.shape
    if (row_tile is not None and n % row_tile == 0
            and (row_tile % 8 == 0 or row_tile == n)):
        tm = row_tile
    else:
        tm = _pick_row_tile(n, jnp.dtype(positive_mask.dtype).itemsize)
    grid = (n // tm,)

    kernel = functools.partial(ntxent_kernel, temperature=float(temperature),
                               n_total=n, row_tile=tm)
    out = pl.pallas_call(
        kernel,
        out_shape=jax.ShapeDtypeStruct((1, 1), jnp.float32),
        grid=grid,
        in_specs=[
            pl.BlockSpec((n, d), lambda i: (0, 0)),    # features: fetched once, resident
            pl.BlockSpec((tm, n), lambda i: (i, 0)),   # positive mask row tile (streamed)
            pl.BlockSpec((tm, n), lambda i: (i, 0)),   # negative mask row tile (streamed)
        ],
        out_specs=pl.BlockSpec((1, 1), lambda i: (0, 0)),        # resident accumulator
        scratch_shapes=[pltpu.VMEM((d, n), matmul_dtype)],       # normalized features^T
        compiler_params=pltpu.CompilerParams(
            dimension_semantics=("arbitrary",),                  # sequential accumulation
            vmem_limit_bytes=48 * 1024 * 1024,                   # < v7x 64 MiB physical
        ),
    )(features, positive_mask, negative_mask)
    return out[0, 0]


def ntxent_reference(features, positive_mask, negative_mask, temperature=TEMPERATURE):
    """Pure-JAX reference mirroring the PyTorch forward (non-distributed)."""
    n = features.shape[0]
    norm = jnp.sqrt(jnp.sum(features * features, axis=1, keepdims=True))
    denom = jnp.maximum(norm * norm.T, COS_EPS)
    sim = (features @ features.T) / denom / temperature
    e = jnp.exp(sim)
    off = 1.0 - jnp.eye(n, dtype=jnp.float32)
    pm = positive_mask * off
    nm = negative_mask * off
    psum = jnp.sum(pm, axis=1)
    psum = jnp.where(psum == 0.0, 1.0, psum)
    neg = jnp.sum(e * nm, axis=1, keepdims=True)
    lp = -jnp.log(e / neg + LOG_EPS) * pm
    return jnp.mean(jnp.sum(lp, axis=1) / psum)


if __name__ == "__main__":
    key = jax.random.PRNGKey(0)

    # Case 1: tiny shapes implied by the module's forward (features [N, D], masks [N, N]).
    N, D = 8, 32
    kf, kp = jax.random.split(key)
    features = jax.random.normal(kf, (N, D), dtype=jnp.float32)
    positive_mask = (jax.random.uniform(kp, (N, N)) > 0.5).astype(jnp.float32)
    negative_mask = 1.0 - positive_mask

    loss = jax.block_until_ready(ntxent_pallas(features, positive_mask, negative_mask))
    ref = ntxent_reference(features, positive_mask, negative_mask)
    assert jnp.allclose(loss, ref, rtol=1e-4, atol=1e-4), (loss, ref)

    # Case 2: exercise the row-tiled accumulation path (grid > 1).
    N2, D2 = 256, 32
    kf2, kp2 = jax.random.split(kp)
    features2 = jax.random.normal(kf2, (N2, D2), dtype=jnp.float32)
    pm2 = (jax.random.uniform(kp2, (N2, N2)) > 0.5).astype(jnp.float32)
    nm2 = 1.0 - pm2

    loss2 = jax.block_until_ready(ntxent_pallas(features2, pm2, nm2, row_tile=128))
    ref2 = ntxent_reference(features2, pm2, nm2)
    assert jnp.allclose(loss2, ref2, rtol=1e-4, atol=1e-4), (loss2, ref2)

    print("KERNEL_OK")
</pallas_src>

<mosaic_0001>
module attributes {stable_mosaic.version = 11 : i64} {
  func.func @ntxent_kernel(%arg0: i32, %arg1: memref<8x32xf32, #tpu.memory_space<vmem>>, %arg2: memref<8x8xf32, #tpu.memory_space<vmem>>, %arg3: memref<8x8xf32, #tpu.memory_space<vmem>>, %arg4: memref<1x1xf32, #tpu.memory_space<vmem>>, %arg5: memref<32x8xf32, #tpu.memory_space<vmem>>) attributes {dimension_semantics = [#tpu.dimension_semantics<arbitrary>], iteration_bounds = array<i64: 1>, scalar_prefetch = 0 : i64, scratch_operands = 1 : i64, tpu.core_type = #tpu.core_type<tc>, window_params = [{pipeline_mode = #tpu.pipeline_mode<synchronous>, transform_indices = @transform_0, window_bounds = array<i64: 8, 32>}, {transform_indices = @transform_1, window_bounds = array<i64: 8, 8>}, {transform_indices = @transform_2, window_bounds = array<i64: 8, 8>}, {pipeline_mode = #tpu.pipeline_mode<synchronous>, transform_indices = @transform_3, window_bounds = array<i64: 1, 1>}]} {
    %c0_i32 = arith.constant 0 : i32
    %0 = arith.cmpi eq, %arg0, %c0_i32 : i32
    %1 = arith.extui %0 : i1 to i32
    %c0_i32_0 = arith.constant 0 : i32
    %2 = arith.cmpi ne, %1, %c0_i32_0 : i32
    scf.if %2 {
      %c0_26 = arith.constant 0 : index
      %c0_27 = arith.constant 0 : index
      %66 = vector.load %arg1[%c0_26, %c0_27] : memref<8x32xf32, #tpu.memory_space<vmem>>, vector<8x32xf32>
      %67 = arith.mulf %66, %66 : vector<8x32xf32>
      %cst_28 = arith.constant dense<0.000000e+00> : vector<8xf32>
      %68 = vector.multi_reduction <add>, %67, %cst_28 [1] : vector<8x32xf32> to vector<8xf32>
      %69 = vector.shape_cast %68 : vector<8xf32> to vector<8x1xf32>
      %70 = math.sqrt %69 : vector<8x1xf32>
      %cst_29 = arith.constant 9.99999974E-5 : f32
      %71 = vector.broadcast %cst_29 : f32 to vector<8x1xf32>
      %72 = arith.maximumf %70, %71 : vector<8x1xf32>
      %cst_30 = arith.constant 1.000000e+00 : f32
      %73 = vector.broadcast %cst_30 : f32 to vector<8x1xf32>
      %74 = arith.divf %73, %72 : vector<8x1xf32>
      %75 = vector.broadcast %74 : vector<8x1xf32> to vector<8x32xf32>
      %76 = arith.mulf %66, %75 : vector<8x32xf32>
      %77 = tpu.transpose %76, [1, 0] : vector<8x32xf32> -> vector<32x8xf32>
      %c0_31 = arith.constant 0 : index
      %c0_32 = arith.constant 0 : index
      %78 = vector.load %arg5[%c0_31, %c0_32] : memref<32x8xf32, #tpu.memory_space<vmem>>, vector<32x8xf32>
      tpu.vector_store %arg5[%c0_31, %c0_32], %77 {strides = array<i32>} : memref<32x8xf32, #tpu.memory_space<vmem>>, vector<32x8xf32>,
      %cst_33 = arith.constant 0.000000e+00 : f32
      %79 = vector.broadcast %cst_33 : f32 to vector<1x1xf32>
      %c0_34 = arith.constant 0 : index
      %c0_35 = arith.constant 0 : index
      %80 = vector.load %arg4[%c0_34, %c0_35] : memref<1x1xf32, #tpu.memory_space<vmem>>, vector<1x1xf32>
      tpu.vector_store %arg4[%c0_34, %c0_35], %79 {strides = array<i32>} : memref<1x1xf32, #tpu.memory_space<vmem>>, vector<1x1xf32>,
    } else {
    }
    %c8_i32 = arith.constant 8 : i32
    %3 = arith.muli %arg0, %c8_i32 : i32
    %4 = tpu.assume_multiple %3, 8 : i32
    %5 = arith.index_cast %4 : i32 to index
    %c0 = arith.constant 0 : index
    %6 = vector.load %arg1[%5, %c0] : memref<8x32xf32, #tpu.memory_space<vmem>>, vector<8x32xf32>
    %7 = arith.mulf %6, %6 : vector<8x32xf32>
    %cst = arith.constant dense<0.000000e+00> : vector<8xf32>
    %8 = vector.multi_reduction <add>, %7, %cst [1] : vector<8x32xf32> to vector<8xf32>
    %9 = vector.shape_cast %8 : vector<8xf32> to vector<8x1xf32>
    %10 = math.sqrt %9 : vector<8x1xf32>
    %cst_1 = arith.constant 9.99999974E-5 : f32
    %11 = vector.broadcast %cst_1 : f32 to vector<8x1xf32>
    %12 = arith.maximumf %10, %11 : vector<8x1xf32>
    %cst_2 = arith.constant 1.000000e+00 : f32
    %13 = vector.broadcast %cst_2 : f32 to vector<8x1xf32>
    %14 = arith.divf %13, %12 : vector<8x1xf32>
    %15 = vector.broadcast %14 : vector<8x1xf32> to vector<8x32xf32>
    %16 = arith.mulf %6, %15 : vector<8x32xf32>
    %c0_3 = arith.constant 0 : index
    %c0_4 = arith.constant 0 : index
    %17 = vector.load %arg5[%c0_3, %c0_4] : memref<32x8xf32, #tpu.memory_space<vmem>>, vector<32x8xf32>
    %cst_5 = arith.constant dense<0.000000e+00> : vector<8x8xf32>
    %18 = tpu.matmul %16, %17, %cst_5 {dimension_numbers = #tpu.dot_dimension_numbers<[1], [0], [0], [1], [0, 0, 1, 1], [], []>} : vector<8x32xf32>, vector<32x8xf32>, vector<8x8xf32> -> vector<8x8xf32>
    %cst_6 = arith.constant 1.000000e+01 : f32
    %19 = vector.broadcast %cst_6 : f32 to vector<8x8xf32>
    %20 = arith.mulf %18, %19 : vector<8x8xf32>
    %c0_7 = arith.constant 0 : index
    %c0_8 = arith.constant 0 : index
    %21 = vector.load %arg2[%c0_7, %c0_8] : memref<8x8xf32, #tpu.memory_space<vmem>>, vector<8x8xf32>
    %c0_9 = arith.constant 0 : index
    %c0_10 = arith.constant 0 : index
    %22 = vector.load %arg3[%c0_9, %c0_10] : memref<8x8xf32, #tpu.memory_space<vmem>>, vector<8x8xf32>
    %23 = tpu.iota {dimensions = array<i32: 0>} : vector<8x8xi32>
    %24 = vector.broadcast %4 : i32 to vector<8x8xi32>
    %25 = arith.addi %24, %23 : vector<8x8xi32>
    %26 = tpu.iota {dimensions = array<i32: 1>} : vector<8x8xi32>
    %27 = arith.cmpi ne, %25, %26 : vector<8x8xi32>
    %28 = arith.extui %27 : vector<8x8xi1> to vector<8x8xi32>
    %29 = arith.sitofp %28 : vector<8x8xi32> to vector<8x8xf32>
    %30 = arith.mulf %21, %29 : vector<8x8xf32>
    %31 = arith.mulf %22, %29 : vector<8x8xf32>
    %cst_11 = arith.constant dense<0.000000e+00> : vector<8xf32>
    %32 = vector.multi_reduction <add>, %30, %cst_11 [1] : vector<8x8xf32> to vector<8xf32>
    %33 = vector.shape_cast %32 : vector<8xf32> to vector<8x1xf32>
    %cst_12 = arith.constant 0.000000e+00 : f32
    %34 = vector.broadcast %cst_12 : f32 to vector<8x1xf32>
    %35 = arith.cmpf oeq, %33, %34 : vector<8x1xf32>
    %cst_13 = arith.constant 1.000000e+00 : f32
    %36 = vector.broadcast %cst_13 : f32 to vector<8x1xf32>
    %37 = arith.select %35, %36, %33 : vector<8x1xi1>, vector<8x1xf32>
    %cst_14 = arith.constant 1.000000e+01 : f32
    %38 = vector.broadcast %cst_14 : f32 to vector<8x8xf32>
    %39 = arith.subf %20, %38 : vector<8x8xf32>
    %40 = math.exp %39 : vector<8x8xf32>
    %41 = arith.mulf %40, %31 : vector<8x8xf32>
    %cst_15 = arith.constant dense<0.000000e+00> : vector<8xf32>
    %42 = vector.multi_reduction <add>, %41, %cst_15 [1] : vector<8x8xf32> to vector<8xf32>
    %43 = vector.shape_cast %42 : vector<8xf32> to vector<8x1xf32>
    %cst_16 = arith.constant 1.000000e-30 : f32
    %44 = vector.broadcast %cst_16 : f32 to vector<8x1xf32>
    %45 = arith.maximumf %43, %44 : vector<8x1xf32>
    %46 = tpu.reciprocal %45 : vector<8x1xf32> -> vector<8x1xf32>
    %47 = vector.broadcast %46 : vector<8x1xf32> to vector<8x8xf32>
    %48 = arith.mulf %40, %47 : vector<8x8xf32>
    %cst_17 = arith.constant 9.99999997E-7 : f32
    %49 = vector.broadcast %cst_17 : f32 to vector<8x8xf32>
    %50 = arith.addf %48, %49 : vector<8x8xf32>
    %51 = math.log %50 : vector<8x8xf32>
    %cst_18 = arith.constant 0.000000e+00 : f32
    %52 = vector.broadcast %cst_18 : f32 to vector<8x8xf32>
    %53 = arith.subf %52, %51 : vector<8x8xf32>
    %54 = arith.mulf %53, %30 : vector<8x8xf32>
    %cst_19 = arith.constant dense<0.000000e+00> : vector<8xf32>
    %55 = vector.multi_reduction <add>, %54, %cst_19 [1] : vector<8x8xf32> to vector<8xf32>
    %56 = vector.shape_cast %55 : vector<8xf32> to vector<8x1xf32>
    %57 = tpu.reciprocal %37 : vector<8x1xf32> -> vector<8x1xf32>
    %58 = arith.mulf %56, %57 : vector<8x1xf32>
    %cst_20 = arith.constant dense<0.000000e+00> : vector<1xf32>
    %59 = vector.multi_reduction <add>, %58, %cst_20 [0] : vector<8x1xf32> to vector<1xf32>
    %60 = vector.shape_cast %59 : vector<1xf32> to vector<1x1xf32>
    %c0_21 = arith.constant 0 : index
    %c0_22 = arith.constant 0 : index
    %61 = vector.load %arg4[%c0_21, %c0_22] : memref<1x1xf32, #tpu.memory_space<vmem>>, vector<1x1xf32>
    %cst_23 = arith.constant 1.250000e-01 : f32
    %62 = vector.broadcast %cst_23 : f32 to vector<1x1xf32>
    %63 = arith.mulf %60, %62 : vector<1x1xf32>
    %64 = arith.addf %61, %63 : vector<1x1xf32>
    %c0_24 = arith.constant 0 : index
    %c0_25 = arith.constant 0 : index
    %65 = vector.load %arg4[%c0_24, %c0_25] : memref<1x1xf32, #tpu.memory_space<vmem>>, vector<1x1xf32>
    tpu.vector_store %arg4[%c0_24, %c0_25], %64 {strides = array<i32>} : memref<1x1xf32, #tpu.memory_space<vmem>>, vector<1x1xf32>,
    return
  }
  func.func @transform_0(%arg0: i32) -> (i32, i32) {
    %c0_i32 = arith.constant 0 : i32
    %c0_i32_0 = arith.constant 0 : i32
    %c0_i32_1 = arith.constant 0 : i32
    return %c0_i32, %c0_i32_0 : i32, i32
  }
  func.func @transform_1(%arg0: i32) -> (i32, i32) {
    %c0_i32 = arith.constant 0 : i32
    %c0_i32_0 = arith.constant 0 : i32
    return %arg0, %c0_i32 : i32, i32
  }
  func.func @transform_2(%arg0: i32) -> (i32, i32) {
    %c0_i32 = arith.constant 0 : i32
    %c0_i32_0 = arith.constant 0 : i32
    return %arg0, %c0_i32 : i32, i32
  }
  func.func @transform_3(%arg0: i32) -> (i32, i32) {
    %c0_i32 = arith.constant 0 : i32
    %c0_i32_0 = arith.constant 0 : i32
    %c0_i32_1 = arith.constant 0 : i32
    return %c0_i32, %c0_i32_0 : i32, i32
  }
}

</mosaic_0001>

<llo_original>
// kernel: tpu_custom_call.1
$region0: #{tpu_custom_call.1}
  #allocation0 [shape = 'u32[]', space=smem, size = 0x4, offset = 0x4, fixed_abs, tag = 'smem constant byte address 0x4 - core index']
  #allocation1 [shape = 'u32[144,128]{1,0:T(1,128)}', space=vmem, size = 0x12000, scoped, tag = 'internal scratch']
  #allocation2 [shape = 'f32[32,8]{1,0:T(8,128)}', space=vmem, size = 0x4000, scoped, tag = 'scratch operand']
  %s0 = inlined_call_operand.hbm [shape: f32[8,32], index: 0, kind: input, shape index: {}]
  %s1 = inlined_call_operand.hbm [shape: f32[8,8], index: 1, kind: input, shape index: {}]
  %s2 = inlined_call_operand.hbm [shape: f32[8,8], index: 2, kind: input, shape index: {}]
  %s3 = inlined_call_operand.hbm [shape: f32[1,1], index: 3, kind: output, shape index: {}]
  %s4 = sld [smem:[#allocation0]]
  $region38: #{tpu_custom_call.1} parent=0
    _
  %s6 = ssub.s32 1, %s4
  %s7 = scalar_select 0, %s6, %s4
  $region1: #{tpu_custom_call.1} parent=0
    #allocation3 [shape = 'u8[4096]{0}', space=vmem, size = 0x1000, scoped, tag = 'input window, operand 0, single buffered']
    #allocation4 [shape = 's32[1]{0}', space=sflag, size = 0x4, scoped, tag = 'scoped memory for tpu_custom_call.1']
    #allocation5 [shape = 's32[1]{0}', space=sflag, size = 0x4, scoped, tag = 'scoped memory for tpu_custom_call.1']
    #allocation6 [shape = 'u8[4096]{0}', space=vmem, size = 0x1000, scoped, tag = 'input window, operand 1, single buffered']
    #allocation7 [shape = 's32[1]{0}', space=sflag, size = 0x4, scoped, tag = 'scoped memory for tpu_custom_call.1']
    #allocation8 [shape = 'u8[4096]{0}', space=vmem, size = 0x1000, scoped, tag = 'input window, operand 2, single buffered']
    #allocation9 [shape = 'u8[512]{0}', space=vmem, size = 0x400, scoped, tag = 'output window, operand 0, single buffered']
    %8 = vsyncpa [#allocation4], 0
    %9 = vsyncpa [#allocation7], 0
    %10 = vsyncpa [#allocation5], 0
    // Predicated region
    $region2: #{tpu_custom_call.1} parent=1 // pred_check
      _
    $region3: #{tpu_custom_call.1} parent=1 // pred_check_branch
      %12 = sbr.rel (0) target = $region5
    $region4: #{tpu_custom_call.1} parent=1 // pred_region
      %s14 = ssub.s32 128, 128
      %15 = vsyncadd [#allocation4], %s14
      %s17 = sshll.u32 [#allocation3], 4
      %s18 = int_to_ptr.vmem [resolvable:$true] %s17
      %20 = dma.hbm_to_vmem [thread:$0]  %s0, 128, %s18, [#allocation4]
    $region5: #{tpu_custom_call.1} parent=1 // pred_fallthru
      _
    // Predicated region
    $region6: #{tpu_custom_call.1} parent=1 // pred_check
      _
    $region7: #{tpu_custom_call.1} parent=1 // pred_check_branch
      %22 = sbr.rel (0) target = $region9
    $region8: #{tpu_custom_call.1} parent=1 // pred_region
      %s24 = ssub.s32 128, 128
      %25 = vsyncadd [#allocation7], %s24
      %s27 = sshll.u32 [#allocation6], 4
      %s28 = int_to_ptr.vmem [resolvable:$true] %s27
      %30 = dma.hbm_to_vmem [thread:$0]  %s1, 128, %s28, [#allocation7]
    $region9: #{tpu_custom_call.1} parent=1 // pred_fallthru
      _
    // Predicated region
    $region10: #{tpu_custom_call.1} parent=1 // pred_check
      _
    $region11: #{tpu_custom_call.1} parent=1 // pred_check_branch
      %32 = sbr.rel (0) target = $region13
    $region12: #{tpu_custom_call.1} parent=1 // pred_region
      %s34 = ssub.s32 128, 128
      %35 = vsyncadd [#allocation7], %s34
      %s37 = sshll.u32 [#allocation8], 4
      %s38 = int_to_ptr.vmem [resolvable:$true] %s37
      %40 = dma.hbm_to_vmem [thread:$0]  %s2, 128, %s38, [#allocation7]
    $region13: #{tpu_custom_call.1} parent=1 // pred_fallthru
      _
    // Predicated region
    $region14: #{tpu_custom_call.1} parent=1 // pred_check
      _
    $region15: #{tpu_custom_call.1} parent=1 // pred_check_branch
      %42 = sbr.rel (0) target = $region17
    $region16: #{tpu_custom_call.1} parent=1 // pred_region
      %43 = dma.done [#allocation4], 128
    $region17: #{tpu_custom_call.1} parent=1 // pred_fallthru
      _
    // Predicated region
    $region18: #{tpu_custom_call.1} parent=1 // pred_check
      _
    $region19: #{tpu_custom_call.1} parent=1 // pred_check_branch
      %45 = sbr.rel (0) target = $region21
    $region20: #{tpu_custom_call.1} parent=1 // pred_region
      %46 = dma.done [#allocation7], 128
    $region21: #{tpu_custom_call.1} parent=1 // pred_fallthru
      _
    // Predicated region
    $region22: #{tpu_custom_call.1} parent=1 // pred_check
      _
    $region23: #{tpu_custom_call.1} parent=1 // pred_check_branch
      %48 = sbr.rel (0) target = $region25
    $region24: #{tpu_custom_call.1} parent=1 // pred_region
      %49 = dma.done [#allocation7], 128
    $region25: #{tpu_custom_call.1} parent=1 // pred_fallthru
      _
    %p50 = scmp.eq.s32.totalorder 0, 0
    // Predicated region
    $region26: #{tpu_custom_call.1} parent=1 // pred_check
      %p51 = pneg %p50
    $region27: #{tpu_custom_call.1} parent=1 // pred_check_branch
      %53 = sbr.rel (%p51) target = $region29
    $region28: #{tpu_custom_call.1} parent=1 // pred_region
      %v54 = vld [vmem:[#allocation3] sm:$0xff]
      %v55 = vmul.f32 %v54, %v54
      %vm56 = vcmask 261120
      %v57 = vsel %vm56, %v55, 0.0
      %58 = vadd.xlane.f32.xlu0 %v57
      %v59 = vpop.xlane.xlu0 %58
      %v60 = vrsqrt.pop %v59
      %v61 = vmul.f32 %v59, %v60
      %vm62 = vcmp.eq.f32.partialorder %v59, inf
      %v63 = vsel %vm62, %v59, %v61
      %vm64 = vcmp.eq.f32.partialorder %v59, 0.0
      %v65 = vand.u32 %v59, 2147483648
      %v66 = vsel %vm64, %v65, %v63
      %v67 = vmax.f32 %v66, 0.0001
      %v68 = vrcp.pop %v67
      %v69 = vmul.f32 1.0, %v68
      %v70 = vmul.f32 %v54, %v69
      %71 = vxpose.xlu0.b32.start [1/16] %v70, 128
      %72 = vxpose.xlu0.b32.cont [2/16] 0.0, 128
      %73 = vxpose.xlu0.b32.cont [3/16] 0.0, 128
      %74 = vxpose.xlu0.b32.cont [4/16] 0.0, 128
      %75 = vxpose.xlu0.b32.cont [5/16] 0.0, 128
      %76 = vxpose.xlu0.b32.cont [6/16] 0.0, 128
      %77 = vxpose.xlu0.b32.cont [7/16] 0.0, 128
      %78 = vxpose.xlu0.b32.cont [8/16] 0.0, 128
      %79 = vxpose.xlu0.b32.cont [9/16] 0.0, 128
      %80 = vxpose.xlu0.b32.cont [10/16] 0.0, 128
      %81 = vxpose.xlu0.b32.cont [11/16] 0.0, 128
      %82 = vxpose.xlu0.b32.cont [12/16] 0.0, 128
      %83 = vxpose.xlu0.b32.cont [13/16] 0.0, 128
      %84 = vxpose.xlu0.b32.cont [14/16] 0.0, 128
      %85 = vxpose.xlu0.b32.cont [15/16] 0.0, 128
      %86 = vxpose.xlu0.b32.end [16/16] 0.0, 128
      %v87 = vpop.trf.xlu0
      %v88 = vpop.trf.xlu0
      %v89 = vpop.trf.xlu0
      %v90 = vpop.trf.xlu0
      %v91 = vpop.trf.xlu0
      %v92 = vpop.trf.xlu0
      %v93 = vpop.trf.xlu0
      %v94 = vpop.trf.xlu0
      %v95 = vpop.trf.xlu0
      %v96 = vpop.trf.xlu0
      %v97 = vpop.trf.xlu0
      %v98 = vpop.trf.xlu0
      %v99 = vpop.trf.xlu0
      %v100 = vpop.trf.xlu0
      %v101 = vpop.trf.xlu0
      %v102 = vpop.trf.xlu0
      %vm103 = vcmask 64512
      %104 = vst.msk [vmem:[#allocation2] sm:$0xff] %vm103, %v87
      %105 = vst.msk [vmem:[#allocation2 + $0x8] sm:$0xff] %vm103, %v88
      %106 = vst.msk [vmem:[#allocation2 + $0x10] sm:$0xff] %vm103, %v89
      %107 = vst.msk [vmem:[#allocation2 + $0x18] sm:$0xff] %vm103, %v90
      %vm108 = vcmask 0
      %109 = vst.msk [vmem:[#allocation9] sm:$0x1] %vm108, 0.0
    $region29: #{tpu_custom_call.1} parent=1 // pred_fallthru
      _
    %s110 = smul.u32 0, 8
    %s111 = scalar_lea.vmem [#allocation3], %s110
    %v112 = vld [vmem:[%s111] sm:$0xff]
    %v113 = vmul.f32 %v112, %v112
    %vm114 = vcmask 261120
    %v115 = vsel %vm114, %v113, 0.0
    %116 = vadd.xlane.f32.xlu0 %v115
    %v117 = vpop.xlane.xlu0 %116
    %v118 = vrsqrt.pop %v117
    %v119 = vmul.f32 %v117, %v118
    %vm120 = vcmp.eq.f32.partialorder %v117, inf
    %v121 = vsel %vm120, %v117, %v119
    %vm122 = vcmp.eq.f32.partialorder %v117, 0.0
    %v123 = vand.u32 %v117, 2147483648
    %v124 = vsel %vm122, %v123, %v121
    %v125 = vmax.f32 %v124, 0.0001
    %v126 = vrcp.pop %v125
    %v127 = vmul.f32 1.0, %v126
    %v128 = vmul.f32 %v112, %v127
    %v129 = vld [vmem:[#allocation2] sm:$0xff]
    %v130 = vld [vmem:[#allocation2 + $0x8] sm:$0xff]
    %v131 = vld [vmem:[#allocation2 + $0x10] sm:$0xff]
    %v132 = vld [vmem:[#allocation2 + $0x18] sm:$0xff]
    %v134 = vsel %vm114, %v128, 0
    %136 = vmatprep.subr.mxu0 0.0
    %137 = vmatpush1.msra.mxu0 0.0
    %138 = vmatprep.subr.mxu0 0.0
    %139 = vmatpush1.msra.mxu0 0.0
    %140 = vmatprep.subr.mxu0 0.0
    %141 = vmatpush1.msra.mxu0 0.0
    %142 = vmatprep.subr.mxu0 0.0
    %143 = vmatpush1.msra.mxu0 0.0
    %144 = vmatprep.subr.mxu0 0.0
    %145 = vmatpush1.msra.mxu0 0.0
    %146 = vmatprep.subr.mxu0 0.0
    %147 = vmatpush1.msra.mxu0 0.0
    %148 = vmatprep.subr.mxu0 0.0
    %149 = vmatpush1.msra.mxu0 0.0
    %150 = vmatprep.subr.mxu0 0.0
    %151 = vmatpush1.msra.mxu0 0.0
    %152 = vmatprep.subr.mxu0 0.0
    %153 = vmatpush1.msra.mxu0 0.0
    %154 = vmatprep.subr.mxu0 0.0
    %155 = vmatpush1.msra.mxu0 0.0
    %156 = vmatprep.subr.mxu0 0.0
    %157 = vmatpush1.msra.mxu0 0.0
    %158 = vmatprep.subr.mxu0 0.0
    %159 = vmatpush1.msra.mxu0 0.0
    %160 = vmatprep.subr.mxu0 0.0
    %161 = vmatpush1.msra.mxu0 %v132
    %162 = vmatprep.subr.mxu0 0.0
    %163 = vmatpush1.msra.mxu0 %v131
    %164 = vmatprep.subr.mxu0 0.0
    %165 = vmatpush1.msra.mxu0 %v130
    %166 = vmatprep.subr.mxu0 0.0
    %167 = vmatpush1.msra.mxu0 %v129
    %168 = vmatprep.subr.mxu0 0.0
    %169 = vmatpush2.msra.mxu0 0.0
    %170 = vmatprep.subr.mxu0 0.0
    %171 = vmatpush2.msra.mxu0 0.0
    %172 = vmatprep.subr.mxu0 0.0
    %173 = vmatpush2.msra.mxu0 0.0
    %174 = vmatprep.subr.mxu0 0.0
    %175 = vmatpush2.msra.mxu0 0.0
    %176 = vmatprep.subr.mxu0 0.0
    %177 = vmatpush2.msra.mxu0 0.0
    %178 = vmatprep.subr.mxu0 0.0
    %179 = vmatpush2.msra.mxu0 0.0
    %180 = vmatprep.subr.mxu0 0.0
    %181 = vmatpush2.msra.mxu0 0.0
    %182 = vmatprep.subr.mxu0 0.0
    %183 = vmatpush2.msra.mxu0 0.0
    %184 = vmatprep.subr.mxu0 0.0
    %185 = vmatpush2.msra.mxu0 0.0
    %186 = vmatprep.subr.mxu0 0.0
    %187 = vmatpush2.msra.mxu0 0.0
    %188 = vmatprep.subr.mxu0 0.0
    %189 = vmatpush2.msra.mxu0 0.0
    %190 = vmatprep.subr.mxu0 0.0
    %191 = vmatpush2.msra.mxu0 0.0
    %192 = vmatprep.subr.mxu0 0.0
    %193 = vmatpush2.msra.mxu0 0.0
    %194 = vmatprep.subr.mxu0 0.0
    %195 = vmatpush2.msra.mxu0 0.0
    %196 = vmatprep.subr.mxu0 0.0
    %197 = vmatpush2.msra.mxu0 0.0
    %198 = vmatprep.subr.mxu0 0.0
    %199 = vmatpush2.msra.mxu0 0.0
    %200 = vmatprep.mubr.f32.mxu0 0.0
    %201 = vmatmul.mubr.f32.gmra.mxu0 %v134
    %v202 = vpop.f32.mrf.mxu0
    %v203 = vadd.f32 0.0, %v202
    %v204 = vpop.f32.mrf.mxu0
    %205 = vdwg.mxu0
    %v206 = vmul.f32 %v203, 10.0
    %v207 = vld [vmem:[#allocation6] sm:$0xff]
    %v208 = vld [vmem:[#allocation8] sm:$0xff]
    %v209 = vlaneseq
    %v210 = vshrl.u32 %v209, 7
    %v211 = vstv %s110
    %v212 = vadd.s32 %v211, %v210
    %v213 = vlaneseq
    %v214 = vand.u32 %v213, 127
    %vm215 = vcmp.ne.s32.totalorder %v212, %v214
    %v216 = vsel %vm215, 1, 0
    %v217 = vcvt.s32.f32 %v216
    %v218 = vmul.f32 %v207, %v217
    %v219 = vmul.f32 %v208, %v217
    %vm220 = vcmask 64512
    %v221 = vsel %vm220, %v218, 0.0
    %222 = vadd.xlane.f32.xlu0 %v221
    %v223 = vpop.xlane.xlu0 %222
    %vm224 = vcmp.eq.f32.partialorder %v223, 0.0
    %v225 = vsel %vm224, 1.0, %v223
    %v226 = vsub.f32 %v206, 10.0
    %v227 = vmul.f32 %v226, 1.442695
    %v228 = vpow.pop %v227
    %v229 = vmul.f32 %v228, %v219
    %v230 = vsel %vm220, %v229, 0.0
    %231 = vadd.xlane.f32.xlu0 %v230
    %v232 = vpop.xlane.xlu0 %231
    %v233 = vmax.f32 %v232, 1e-30
    %v234 = vrcp.pop %v233
    %v235 = vmul.f32 %v228, %v234
    %v236 = vadd.f32 %v235, 1e-06
    %v237 = vlog2.pop %v236
    %v238 = vmul.f32 %v237, 0.6931472
    %v239 = vsub.f32 0.0, %v238
    %v240 = vmul.f32 %v239, %v218
    %v241 = vsel %vm220, %v240, 0.0
    %242 = vadd.xlane.f32.xlu0 %v241
    %v243 = vpop.xlane.xlu0 %242
    %v244 = vrcp.pop %v225
    %v245 = vmul.f32 %v243, %v244
    %v246 = vrot.slane %v245, 4
    %v247 = vadd.f32 %v245, %v246
    %v248 = vrot.slane %v247, 2
    %v249 = vadd.f32 %v247, %v248
    %v250 = vrot.slane %v249, 1
    %v251 = vadd.f32 %v249, %v250
    %v252 = vld [vmem:[#allocation9] sm:$0x1]
    %v253 = vmul.f32 %v251, 0.125
    %v254 = vadd.f32 %v252, %v253
    %vm255 = vcmask 0
    %256 = vst.msk [vmem:[#allocation9] sm:$0x1] %vm255, %v254
    // Predicated region
    $region30: #{tpu_custom_call.1} parent=1 // pred_check
      _
    $region31: #{tpu_custom_call.1} parent=1 // pred_check_branch
      %258 = sbr.rel (0) target = $region33
    $region32: #{tpu_custom_call.1} parent=1 // pred_region
      %s260 = ssub.s32 16, 16
      %261 = vsyncadd [#allocation5], %s260
      %s263 = sshll.u32 [#allocation9], 4
      %s264 = int_to_ptr.vmem [resolvable:$true] %s263
      %266 = dma.vmem_to_hbm [thread:$0]  %s264, 16, %s3, [#allocation5]
    $region33: #{tpu_custom_call.1} parent=1 // pred_fallthru
      _
    // Predicated region
    $region34: #{tpu_custom_call.1} parent=1 // pred_check
      _
    $region35: #{tpu_custom_call.1} parent=1 // pred_check_branch
      %268 = sbr.rel (0) target = $region37
    $region36: #{tpu_custom_call.1} parent=1 // pred_region
      %269 = dma.done [#allocation5], 16
    $region37: #{tpu_custom_call.1} parent=1 // pred_fallthru
      _
    %270 = vsyncpa [#allocation4], 1
    %271 = vsyncpa [#allocation7], 1
    %272 = vsyncpa [#allocation5], 1

</llo_original>
